<compile_context>
chip_gen: v7x
topology: tpu7x:2x2x1
jax: 0.10.0
libtpu: 0.0.40
codegen_flags: <defaults>
</compile_context>

<pallas_src>
import jax
import jax.numpy as jnp
from jax.experimental import pallas as pl
from jax.experimental.pallas import tpu as pltpu


def _round_up(n, m):
    return ((n + m - 1) // m) * m


def _vmem_cap_bytes():
    """Physical VMEM minus headroom for Mosaic internal scratch (generation-aware)."""
    try:
        cap = int(pltpu.get_tpu_info().vmem_capacity_bytes)  # 128 MiB v5e/v6e, 64 MiB/TC v7x
    except Exception:
        cap = 64 << 20                                        # conservative (v7x per-TC)
    return max(cap - (16 << 20), 32 << 20)


def ff_kernel(x_ref, w1_ref, t1_ref, w2_ref, t2_ref, w3_ref, b3_ref, o_ref):
    # x arrives as f32 straight from HBM; cast to the matmul dtype in-kernel
    # (halves x HBM traffic vs. a separate host-side cast pass).
    x = x_ref[...].astype(w1_ref.dtype)
    # Block 1: Linear(no bias, eval-BN scale pre-folded into W) -> shift -> ReLU.
    h = jnp.dot(x, w1_ref[...], preferred_element_type=jnp.float32)
    h = jnp.maximum(h + t1_ref[...], 0.0)                      # f32 epilogue
    # Block 2: same structure.
    h = jnp.dot(h.astype(w2_ref.dtype), w2_ref[...],
                preferred_element_type=jnp.float32)
    h = jnp.maximum(h + t2_ref[...], 0.0)                      # f32 epilogue
    # Output layer: Linear with bias (all widths zero-padded to 128-lane multiples).
    o = jnp.dot(h.astype(w3_ref.dtype), w3_ref[...],
                preferred_element_type=jnp.float32)
    o_ref[...] = (o + b3_ref[...]).astype(o_ref.dtype)


def feed_forward_classifier(x, params, *, compute_dtype=jnp.bfloat16,
                            out_dtype=jnp.float32, block_b=None, lane_mult=128):
    """Runs the fused feed-forward classifier forward pass on TPU."""
    (w1, s1, t1, w2, s2, t2, w3, b3) = params
    B, Din = x.shape
    H1, H2, Dout = w1.shape[1], w2.shape[1], w3.shape[1]

    # ---- host-side parameter folding / padding (one-time cost) ---------------
    # (x @ w) * s + t  ==  x @ (w * s) + t : fold the eval-BN scale in f32, then
    # cast only the folded product to the matmul dtype.
    # All feature widths are zero-padded to lane multiples so intermediates, the
    # MXU N dimension and the output store are lane-dense; ReLU(0 + 0) = 0 and
    # zero weight rows keep the math exact.
    H1p = _round_up(H1, lane_mult)
    H2p = _round_up(H2, lane_mult)
    Dp = _round_up(Dout, lane_mult)
    w1f = jnp.pad(w1 * s1, ((0, 0), (0, H1p - H1))).astype(compute_dtype)
    t1f = jnp.pad(t1, ((0, 0), (0, H1p - H1))).astype(jnp.float32)
    w2f = jnp.pad(w2 * s2, ((0, H1p - H1), (0, H2p - H2))).astype(compute_dtype)
    t2f = jnp.pad(t2, ((0, 0), (0, H2p - H2))).astype(jnp.float32)
    w3p = jnp.pad(w3, ((0, H2p - H2), (0, Dp - Dout))).astype(compute_dtype)
    b3p = jnp.pad(b3, ((0, 0), (0, Dp - Dout))).astype(jnp.float32)

    cap = _vmem_cap_bytes()
    cs = jnp.dtype(compute_dtype).itemsize
    os_ = jnp.dtype(out_dtype).itemsize
    xs = jnp.dtype(x.dtype).itemsize

    def vmem_estimate(bb, weight_bufs):
        resident = ((Din * H1p + H1p * H2p + H2p * Dp) * cs
                    + (H1p + H2p + Dp) * 4) * weight_bufs
        streamed = 2 * bb * Din * xs + 2 * bb * Dp * os_     # double-buffered x / out
        temps = bb * (Din + H1p + H2p + Dp) * 4              # in-kernel f32 intermediates
        return resident + streamed + temps

    # ---- batch tiling --------------------------------------------------------
    if block_b is None:
        if B <= 256:
            block_b = B          # one step: batch too small to be worth splitting
        else:
            # >= 2 grid steps so the 'parallel' batch axis can shard across v7x's
            # two TensorCores; <= 1024 rows keeps VMEM bounded while amortizing
            # the ~0.35us/step grid overhead (v5e/v6e lose nothing to the split).
            block_b = min(_round_up(pl.cdiv(B, 2), 16), 1024)
        # Shrink the tile if the (conservative, double-buffered-weight) estimate
        # would exceed the per-core VMEM budget.
        while vmem_estimate(block_b, 2) > cap and block_b > 128:
            block_b = max(128, _round_up(block_b // 2, 16))
    grid = (pl.cdiv(B, block_b),)

    def run(single_buffer_weights):
        def resident_spec(shape):
            idx_map = lambda i: tuple(0 for _ in shape)
            if single_buffer_weights:
                # Constant index_map => DMA'd once and kept resident; Buffered(1)
                # drops the second (never used) pipeline buffer, halving resident
                # weight VMEM.
                return pl.BlockSpec(shape, idx_map, pipeline_mode=pl.Buffered(1))
            return pl.BlockSpec(shape, idx_map)

        weight_bufs = 1 if single_buffer_weights else 2
        vmem_limit = int(min(max(vmem_estimate(block_b, weight_bufs) + (8 << 20),
                                 32 << 20), cap))
        return pl.pallas_call(
            ff_kernel,
            out_shape=jax.ShapeDtypeStruct((B, Dp), out_dtype),
            grid=grid,
            in_specs=[
                pl.BlockSpec((block_b, Din), lambda i: (i, 0)),  # x: tiled over batch
                resident_spec((Din, H1p)), resident_spec((1, H1p)),
                resident_spec((H1p, H2p)), resident_spec((1, H2p)),
                resident_spec((H2p, Dp)), resident_spec((1, Dp)),
            ],
            out_specs=pl.BlockSpec((block_b, Dp), lambda i: (i, 0)),
            compiler_params=pltpu.CompilerParams(
                dimension_semantics=("parallel",),
                vmem_limit_bytes=vmem_limit),
        )(x, w1f, t1f, w2f, t2f, w3p, b3p)

    try:
        out = run(single_buffer_weights=True)
    except Exception:
        # Fallback for jax versions where pipeline_mode=pl.Buffered(1) on inputs
        # is not supported: identical math, default double-buffered weights.
        out = run(single_buffer_weights=False)

    if Dp != Dout:
        out = out[:, :Dout]
    if Dout == 1:
        out = out.reshape(-1)  # torch.nn.Flatten(start_dim=0) when output_dim == 1
    return out


def init_params(key, input_dim, hidden_dims, output_dim, eps=1e-5):
    """Deterministic synthetic parameters matching the module's shapes."""
    dims = [input_dim, *hidden_dims, output_dim]
    keys = jax.random.split(key, 16)
    ki = iter(keys)

    def linear_w(k, din, dout):
        # PyTorch Linear default: U(-1/sqrt(fan_in), 1/sqrt(fan_in)); stored (din, dout).
        bound = 1.0 / (din ** 0.5)
        return jax.random.uniform(k, (din, dout), jnp.float32, -bound, bound)

    def bn_affine(k, d):
        # Eval-mode BatchNorm1d folded into scale/shift.  BN bias init 0.0 per __init__.
        k1, k2, k3 = jax.random.split(k, 3)
        gamma = 1.0 + 0.1 * jax.random.normal(k1, (1, d), jnp.float32)
        running_mean = 0.1 * jax.random.normal(k2, (1, d), jnp.float32)
        running_var = 1.0 + 0.1 * jax.random.uniform(k3, (1, d), jnp.float32)
        beta = jnp.zeros((1, d), jnp.float32)
        scale = gamma * jax.lax.rsqrt(running_var + eps)
        shift = beta - running_mean * scale
        return scale, shift

    w1 = linear_w(next(ki), dims[0], dims[1])
    s1, t1 = bn_affine(next(ki), dims[1])
    w2 = linear_w(next(ki), dims[1], dims[2])
    s2, t2 = bn_affine(next(ki), dims[2])
    w3 = linear_w(next(ki), dims[2], dims[3])
    b3 = jnp.zeros((1, dims[3]), jnp.float32)  # torch.nn.init.constant_(bias, 0.0)
    return (w1, s1, t1, w2, s2, t2, w3, b3)


def reference_forward(x, params, *, fold_scale=False):
    """Pure-JAX reference.  fold_scale=True mirrors the kernel's (identical-math)
    scale-folded formulation for a tight floating-point comparison."""
    (w1, s1, t1, w2, s2, t2, w3, b3) = params
    if fold_scale:
        h = jnp.maximum(x @ (w1 * s1) + t1, 0.0)
        h = jnp.maximum(h @ (w2 * s2) + t2, 0.0)
    else:
        h = jnp.maximum((x @ w1) * s1 + t1, 0.0)
        h = jnp.maximum((h @ w2) * s2 + t2, 0.0)
    out = h @ w3 + b3
    if out.shape[-1] == 1:
        out = out.reshape(-1)
    return out


if __name__ == "__main__":
    INPUT_DIM, HIDDEN_DIMS, OUTPUT_DIM = 32, [64, 32], 4
    BATCH = 16

    key = jax.random.PRNGKey(0)
    kx, kp = jax.random.split(key)
    X = jax.random.normal(kx, (BATCH, INPUT_DIM), jnp.float32)
    params = init_params(kp, INPUT_DIM, HIDDEN_DIMS, OUTPUT_DIM)

    ref = reference_forward(X, params)                           # module-faithful math
    ref_folded = reference_forward(X, params, fold_scale=True)   # kernel-matched math

    # 1) f32 kernel vs. identical-math reference: tight tolerance.
    out_f32 = jax.block_until_ready(
        feed_forward_classifier(X, params, compute_dtype=jnp.float32))
    assert out_f32.shape == ref.shape
    assert jnp.allclose(out_f32, ref_folded, atol=1e-4, rtol=1e-4)
    # 2) f32 kernel vs. module-order reference: loose enough to absorb any
    #    reduced-precision default matmul reassociation effects.
    assert jnp.allclose(out_f32, ref, atol=2e-2, rtol=2e-2)

    # 3) Fast path (default): bf16 matmul inputs, f32 accumulation/epilogue.
    out_bf16 = jax.block_until_ready(feed_forward_classifier(X, params))
    assert out_bf16.shape == ref.shape
    assert jnp.allclose(out_bf16, ref, atol=1e-1, rtol=1e-1)

    # 4) Exercise the Flatten(start_dim=0) path (output_dim == 1).
    params1 = init_params(kp, INPUT_DIM, HIDDEN_DIMS, 1)
    out1 = jax.block_until_ready(
        feed_forward_classifier(X, params1, compute_dtype=jnp.float32))
    assert out1.shape == (BATCH,)
    assert jnp.allclose(out1, reference_forward(X, params1, fold_scale=True),
                        atol=1e-4, rtol=1e-4)

    # 5) Multi-step batch path (>= 2 grid steps + partial last block).
    Xb = jax.random.normal(kx, (300, INPUT_DIM), jnp.float32)
    outb = jax.block_until_ready(
        feed_forward_classifier(Xb, params, compute_dtype=jnp.float32))
    assert outb.shape == (300, OUTPUT_DIM)
    assert jnp.allclose(outb, reference_forward(Xb, params, fold_scale=True),
                        atol=1e-4, rtol=1e-4)

    print("KERNEL_OK")
</pallas_src>

<mosaic_0001>
module attributes {stable_mosaic.version = 11 : i64} {
  func.func @ff_kernel(%arg0: i32, %arg1: memref<16x32xf32, #tpu.memory_space<vmem>>, %arg2: memref<32x128xf32, #tpu.memory_space<vmem>>, %arg3: memref<1x128xf32, #tpu.memory_space<vmem>>, %arg4: memref<128x128xf32, #tpu.memory_space<vmem>>, %arg5: memref<1x128xf32, #tpu.memory_space<vmem>>, %arg6: memref<128x128xf32, #tpu.memory_space<vmem>>, %arg7: memref<1x128xf32, #tpu.memory_space<vmem>>, %arg8: memref<16x128xf32, #tpu.memory_space<vmem>>) attributes {dimension_semantics = [#tpu.dimension_semantics<parallel>], iteration_bounds = array<i64: 1>, scalar_prefetch = 0 : i64, scratch_operands = 0 : i64, tpu.core_type = #tpu.core_type<tc>, window_params = [{transform_indices = @transform_0, window_bounds = array<i64: 16, 32>}, {pipeline_mode = #tpu.pipeline_mode<synchronous>, transform_indices = @transform_1, window_bounds = array<i64: 32, 128>}, {pipeline_mode = #tpu.pipeline_mode<synchronous>, transform_indices = @transform_2, window_bounds = array<i64: 1, 128>}, {pipeline_mode = #tpu.pipeline_mode<synchronous>, transform_indices = @transform_3, window_bounds = array<i64: 128, 128>}, {pipeline_mode = #tpu.pipeline_mode<synchronous>, transform_indices = @transform_4, window_bounds = array<i64: 1, 128>}, {pipeline_mode = #tpu.pipeline_mode<synchronous>, transform_indices = @transform_5, window_bounds = array<i64: 128, 128>}, {pipeline_mode = #tpu.pipeline_mode<synchronous>, transform_indices = @transform_6, window_bounds = array<i64: 1, 128>}, {transform_indices = @transform_7, window_bounds = array<i64: 16, 128>}]} {
    %c0 = arith.constant 0 : index
    %c0_0 = arith.constant 0 : index
    %0 = vector.load %arg1[%c0, %c0_0] : memref<16x32xf32, #tpu.memory_space<vmem>>, vector<16x32xf32>
    %c0_1 = arith.constant 0 : index
    %c0_2 = arith.constant 0 : index
    %1 = vector.load %arg2[%c0_1, %c0_2] : memref<32x128xf32, #tpu.memory_space<vmem>>, vector<32x128xf32>
    %cst = arith.constant dense<0.000000e+00> : vector<16x128xf32>
    %2 = tpu.matmul %0, %1, %cst {dimension_numbers = #tpu.dot_dimension_numbers<[1], [0], [0], [1], [0, 0, 1, 1], [], []>} : vector<16x32xf32>, vector<32x128xf32>, vector<16x128xf32> -> vector<16x128xf32>
    %c0_3 = arith.constant 0 : index
    %c0_4 = arith.constant 0 : index
    %3 = vector.load %arg3[%c0_3, %c0_4] : memref<1x128xf32, #tpu.memory_space<vmem>>, vector<1x128xf32>
    %4 = vector.broadcast %3 : vector<1x128xf32> to vector<16x128xf32>
    %5 = arith.addf %2, %4 : vector<16x128xf32>
    %cst_5 = arith.constant 0.000000e+00 : f32
    %6 = vector.broadcast %cst_5 : f32 to vector<16x128xf32>
    %7 = arith.maximumf %5, %6 : vector<16x128xf32>
    %c0_6 = arith.constant 0 : index
    %c0_7 = arith.constant 0 : index
    %8 = vector.load %arg4[%c0_6, %c0_7] : memref<128x128xf32, #tpu.memory_space<vmem>>, vector<128x128xf32>
    %cst_8 = arith.constant dense<0.000000e+00> : vector<16x128xf32>
    %9 = tpu.matmul %7, %8, %cst_8 {dimension_numbers = #tpu.dot_dimension_numbers<[1], [0], [0], [1], [0, 0, 1, 1], [], []>} : vector<16x128xf32>, vector<128x128xf32>, vector<16x128xf32> -> vector<16x128xf32>
    %c0_9 = arith.constant 0 : index
    %c0_10 = arith.constant 0 : index
    %10 = vector.load %arg5[%c0_9, %c0_10] : memref<1x128xf32, #tpu.memory_space<vmem>>, vector<1x128xf32>
    %11 = vector.broadcast %10 : vector<1x128xf32> to vector<16x128xf32>
    %12 = arith.addf %9, %11 : vector<16x128xf32>
    %cst_11 = arith.constant 0.000000e+00 : f32
    %13 = vector.broadcast %cst_11 : f32 to vector<16x128xf32>
    %14 = arith.maximumf %12, %13 : vector<16x128xf32>
    %c0_12 = arith.constant 0 : index
    %c0_13 = arith.constant 0 : index
    %15 = vector.load %arg6[%c0_12, %c0_13] : memref<128x128xf32, #tpu.memory_space<vmem>>, vector<128x128xf32>
    %cst_14 = arith.constant dense<0.000000e+00> : vector<16x128xf32>
    %16 = tpu.matmul %14, %15, %cst_14 {dimension_numbers = #tpu.dot_dimension_numbers<[1], [0], [0], [1], [0, 0, 1, 1], [], []>} : vector<16x128xf32>, vector<128x128xf32>, vector<16x128xf32> -> vector<16x128xf32>
    %c0_15 = arith.constant 0 : index
    %c0_16 = arith.constant 0 : index
    %17 = vector.load %arg7[%c0_15, %c0_16] : memref<1x128xf32, #tpu.memory_space<vmem>>, vector<1x128xf32>
    %18 = vector.broadcast %17 : vector<1x128xf32> to vector<16x128xf32>
    %19 = arith.addf %16, %18 : vector<16x128xf32>
    %c0_17 = arith.constant 0 : index
    %c0_18 = arith.constant 0 : index
    %20 = vector.load %arg8[%c0_17, %c0_18] : memref<16x128xf32, #tpu.memory_space<vmem>>, vector<16x128xf32>
    tpu.vector_store %arg8[%c0_17, %c0_18], %19 {strides = array<i32>} : memref<16x128xf32, #tpu.memory_space<vmem>>, vector<16x128xf32>,
    return
  }
  func.func @transform_0(%arg0: i32) -> (i32, i32) {
    %c0_i32 = arith.constant 0 : i32
    %c0_i32_0 = arith.constant 0 : i32
    return %arg0, %c0_i32 : i32, i32
  }
  func.func @transform_1(%arg0: i32) -> (i32, i32) {
    %c0_i32 = arith.constant 0 : i32
    %c0_i32_0 = arith.constant 0 : i32
    %c0_i32_1 = arith.constant 0 : i32
    return %c0_i32, %c0_i32_0 : i32, i32
  }
  func.func @transform_2(%arg0: i32) -> (i32, i32) {
    %c0_i32 = arith.constant 0 : i32
    %c0_i32_0 = arith.constant 0 : i32
    %c0_i32_1 = arith.constant 0 : i32
    return %c0_i32, %c0_i32_0 : i32, i32
  }
  func.func @transform_3(%arg0: i32) -> (i32, i32) {
    %c0_i32 = arith.constant 0 : i32
    %c0_i32_0 = arith.constant 0 : i32
    %c0_i32_1 = arith.constant 0 : i32
    return %c0_i32, %c0_i32_0 : i32, i32
  }
  func.func @transform_4(%arg0: i32) -> (i32, i32) {
    %c0_i32 = arith.constant 0 : i32
    %c0_i32_0 = arith.constant 0 : i32
    %c0_i32_1 = arith.constant 0 : i32
    return %c0_i32, %c0_i32_0 : i32, i32
  }
  func.func @transform_5(%arg0: i32) -> (i32, i32) {
    %c0_i32 = arith.constant 0 : i32
    %c0_i32_0 = arith.constant 0 : i32
    %c0_i32_1 = arith.constant 0 : i32
    return %c0_i32, %c0_i32_0 : i32, i32
  }
  func.func @transform_6(%arg0: i32) -> (i32, i32) {
    %c0_i32 = arith.constant 0 : i32
    %c0_i32_0 = arith.constant 0 : i32
    %c0_i32_1 = arith.constant 0 : i32
    return %c0_i32, %c0_i32_0 : i32, i32
  }
  func.func @transform_7(%arg0: i32) -> (i32, i32) {
    %c0_i32 = arith.constant 0 : i32
    %c0_i32_0 = arith.constant 0 : i32
    return %arg0, %c0_i32 : i32, i32
  }
}

module attributes {stable_mosaic.version = 11 : i64} {
  func.func @ff_kernel(%arg0: i32, %arg1: memref<16x32xf32, #tpu.memory_space<vmem>>, %arg2: memref<32x128xf32, #tpu.memory_space<vmem>>, %arg3: memref<1x128xf32, #tpu.memory_space<vmem>>, %arg4: memref<128x128xf32, #tpu.memory_space<vmem>>, %arg5: memref<1x128xf32, #tpu.memory_space<vmem>>, %arg6: memref<128x128xf32, #tpu.memory_space<vmem>>, %arg7: memref<1x128xf32, #tpu.memory_space<vmem>>, %arg8: memref<16x128xf32, #tpu.memory_space<vmem>>) attributes {dimension_semantics = [#tpu.dimension_semantics<parallel>], iteration_bounds = array<i64: 1>, scalar_prefetch = 0 : i64, scratch_operands = 0 : i64, tpu.core_type = #tpu.core_type<tc>, window_params = [{transform_indices = @transform_0, window_bounds = array<i64: 16, 32>}, {pipeline_mode = #tpu.pipeline_mode<synchronous>, transform_indices = @transform_1, window_bounds = array<i64: 32, 128>}, {pipeline_mode = #tpu.pipeline_mode<synchronous>, transform_indices = @transform_2, window_bounds = array<i64: 1, 128>}, {pipeline_mode = #tpu.pipeline_mode<synchronous>, transform_indices = @transform_3, window_bounds = array<i64: 128, 128>}, {pipeline_mode = #tpu.pipeline_mode<synchronous>, transform_indices = @transform_4, window_bounds = array<i64: 1, 128>}, {pipeline_mode = #tpu.pipeline_mode<synchronous>, transform_indices = @transform_5, window_bounds = array<i64: 128, 128>}, {pipeline_mode = #tpu.pipeline_mode<synchronous>, transform_indices = @transform_6, window_bounds = array<i64: 1, 128>}, {transform_indices = @transform_7, window_bounds = array<i64: 16, 128>}]} {
    %c0 = arith.constant 0 : index
    %c0_0 = arith.constant 0 : index
    %0 = vector.load %arg1[%c0, %c0_0] : memref<16x32xf32, #tpu.memory_space<vmem>>, vector<16x32xf32>
    %c0_1 = arith.constant 0 : index
    %c0_2 = arith.constant 0 : index
    %1 = vector.load %arg2[%c0_1, %c0_2] : memref<32x128xf32, #tpu.memory_space<vmem>>, vector<32x128xf32>
    %cst = arith.constant dense<0.000000e+00> : vector<16x128xf32>
    %2 = tpu.matmul %0, %1, %cst {dimension_numbers = #tpu.dot_dimension_numbers<[1], [0], [0], [1], [0, 0, 1, 1], [], []>} : vector<16x32xf32>, vector<32x128xf32>, vector<16x128xf32> -> vector<16x128xf32>
    %c0_3 = arith.constant 0 : index
    %c0_4 = arith.constant 0 : index
    %3 = vector.load %arg3[%c0_3, %c0_4] : memref<1x128xf32, #tpu.memory_space<vmem>>, vector<1x128xf32>
    %4 = vector.broadcast %3 : vector<1x128xf32> to vector<16x128xf32>
    %5 = arith.addf %2, %4 : vector<16x128xf32>
    %cst_5 = arith.constant 0.000000e+00 : f32
    %6 = vector.broadcast %cst_5 : f32 to vector<16x128xf32>
    %7 = arith.maximumf %5, %6 : vector<16x128xf32>
    %c0_6 = arith.constant 0 : index
    %c0_7 = arith.constant 0 : index
    %8 = vector.load %arg4[%c0_6, %c0_7] : memref<128x128xf32, #tpu.memory_space<vmem>>, vector<128x128xf32>
    %cst_8 = arith.constant dense<0.000000e+00> : vector<16x128xf32>
    %9 = tpu.matmul %7, %8, %cst_8 {dimension_numbers = #tpu.dot_dimension_numbers<[1], [0], [0], [1], [0, 0, 1, 1], [], []>} : vector<16x128xf32>, vector<128x128xf32>, vector<16x128xf32> -> vector<16x128xf32>
    %c0_9 = arith.constant 0 : index
    %c0_10 = arith.constant 0 : index
    %10 = vector.load %arg5[%c0_9, %c0_10] : memref<1x128xf32, #tpu.memory_space<vmem>>, vector<1x128xf32>
    %11 = vector.broadcast %10 : vector<1x128xf32> to vector<16x128xf32>
    %12 = arith.addf %9, %11 : vector<16x128xf32>
    %cst_11 = arith.constant 0.000000e+00 : f32
    %13 = vector.broadcast %cst_11 : f32 to vector<16x128xf32>
    %14 = arith.maximumf %12, %13 : vector<16x128xf32>
    %c0_12 = arith.constant 0 : index
    %c0_13 = arith.constant 0 : index
    %15 = vector.load %arg6[%c0_12, %c0_13] : memref<128x128xf32, #tpu.memory_space<vmem>>, vector<128x128xf32>
    %cst_14 = arith.constant dense<0.000000e+00> : vector<16x128xf32>
    %16 = tpu.matmul %14, %15, %cst_14 {dimension_numbers = #tpu.dot_dimension_numbers<[1], [0], [0], [1], [0, 0, 1, 1], [], []>} : vector<16x128xf32>, vector<128x128xf32>, vector<16x128xf32> -> vector<16x128xf32>
    %c0_15 = arith.constant 0 : index
    %c0_16 = arith.constant 0 : index
    %17 = vector.load %arg7[%c0_15, %c0_16] : memref<1x128xf32, #tpu.memory_space<vmem>>, vector<1x128xf32>
    %18 = vector.broadcast %17 : vector<1x128xf32> to vector<16x128xf32>
    %19 = arith.addf %16, %18 : vector<16x128xf32>
    %c0_17 = arith.constant 0 : index
    %c0_18 = arith.constant 0 : index
    %20 = vector.load %arg8[%c0_17, %c0_18] : memref<16x128xf32, #tpu.memory_space<vmem>>, vector<16x128xf32>
    tpu.vector_store %arg8[%c0_17, %c0_18], %19 {strides = array<i32>} : memref<16x128xf32, #tpu.memory_space<vmem>>, vector<16x128xf32>,
    return
  }
  func.func @transform_0(%arg0: i32) -> (i32, i32) {
    %c0_i32 = arith.constant 0 : i32
    %c0_i32_0 = arith.constant 0 : i32
    return %arg0, %c0_i32 : i32, i32
  }
  func.func @transform_1(%arg0: i32) -> (i32, i32) {
    %c0_i32 = arith.constant 0 : i32
    %c0_i32_0 = arith.constant 0 : i32
    %c0_i32_1 = arith.constant 0 : i32
    return %c0_i32, %c0_i32_0 : i32, i32
  }
  func.func @transform_2(%arg0: i32) -> (i32, i32) {
    %c0_i32 = arith.constant 0 : i32
    %c0_i32_0 = arith.constant 0 : i32
    %c0_i32_1 = arith.constant 0 : i32
    return %c0_i32, %c0_i32_0 : i32, i32
  }
  func.func @transform_3(%arg0: i32) -> (i32, i32) {
    %c0_i32 = arith.constant 0 : i32
    %c0_i32_0 = arith.constant 0 : i32
    %c0_i32_1 = arith.constant 0 : i32
    return %c0_i32, %c0_i32_0 : i32, i32
  }
  func.func @transform_4(%arg0: i32) -> (i32, i32) {
    %c0_i32 = arith.constant 0 : i32
    %c0_i32_0 = arith.constant 0 : i32
    %c0_i32_1 = arith.constant 0 : i32
    return %c0_i32, %c0_i32_0 : i32, i32
  }
  func.func @transform_5(%arg0: i32) -> (i32, i32) {
    %c0_i32 = arith.constant 0 : i32
    %c0_i32_0 = arith.constant 0 : i32
    %c0_i32_1 = arith.constant 0 : i32
    return %c0_i32, %c0_i32_0 : i32, i32
  }
  func.func @transform_6(%arg0: i32) -> (i32, i32) {
    %c0_i32 = arith.constant 0 : i32
    %c0_i32_0 = arith.constant 0 : i32
    %c0_i32_1 = arith.constant 0 : i32
    return %c0_i32, %c0_i32_0 : i32, i32
  }
  func.func @transform_7(%arg0: i32) -> (i32, i32) {
    %c0_i32 = arith.constant 0 : i32
    %c0_i32_0 = arith.constant 0 : i32
    return %arg0, %c0_i32 : i32, i32
  }
}

</mosaic_0001>

<llo_original>
// kernel: tpu_custom_call.1
$region0: #{tpu_custom_call.1}
  #allocation0 [shape = 'u32[]', space=smem, size = 0x4, offset = 0x4, fixed_abs, tag = 'smem constant byte address 0x4 - core index']
  #allocation1 [shape = 'u32[144,128]{1,0:T(1,128)}', space=vmem, size = 0x12000, scoped, tag = 'internal scratch']
  %s0 = inlined_call_operand.hbm [shape: f32[16,32], index: 0, kind: input, shape index: {}]
  %s1 = inlined_call_operand.hbm [shape: f32[32,128], index: 1, kind: input, shape index: {}]
  %s2 = inlined_call_operand.vmem [shape: f32[1,128], index: 2, kind: input, shape index: {}]
  %s3 = inlined_call_operand.hbm [shape: f32[128,128], index: 3, kind: input, shape index: {}]
  %s4 = inlined_call_operand.vmem [shape: f32[1,128], index: 4, kind: input, shape index: {}]
  %s5 = inlined_call_operand.hbm [shape: f32[128,128], index: 5, kind: input, shape index: {}]
  %s6 = inlined_call_operand.vmem [shape: f32[1,128], index: 6, kind: input, shape index: {}]
  %s7 = inlined_call_operand.hbm [shape: f32[16,128], index: 7, kind: output, shape index: {}]
  %s8 = sld [smem:[#allocation0]]
  $region54: #{tpu_custom_call.1} parent=0
    _
  %s10 = ssub.s32 1, %s8
  %s11 = scalar_select 0, %s10, %s8
  $region1: #{tpu_custom_call.1} parent=0
    #allocation2 [shape = 'u8[8192]{0}', space=vmem, size = 0x2000, scoped, tag = 'input window, operand 0, single buffered']
    #allocation3 [shape = 's32[1]{0}', space=sflag, size = 0x4, scoped, tag = 'scoped memory for tpu_custom_call.1']
    #allocation4 [shape = 's32[1]{0}', space=sflag, size = 0x4, scoped, tag = 'scoped memory for tpu_custom_call.1']
    #allocation5 [shape = 'u8[16384]{0}', space=vmem, size = 0x4000, scoped, tag = 'input window, operand 1, single buffered']
    #allocation6 [shape = 's32[1]{0}', space=sflag, size = 0x4, scoped, tag = 'scoped memory for tpu_custom_call.1']
    #allocation7 [shape = 'u8[65536]{0}', space=vmem, size = 0x10000, scoped, tag = 'input window, operand 3, single buffered']
    #allocation8 [shape = 'u8[65536]{0}', space=vmem, size = 0x10000, scoped, tag = 'input window, operand 5, single buffered']
    #allocation9 [shape = 's32[1]{0}', space=sflag, size = 0x4, scoped, tag = 'scoped memory for tpu_custom_call.1']
    #allocation10 [shape = 'u8[8192]{0}', space=vmem, size = 0x2000, scoped, tag = 'output window, operand 0, single buffered']
    %12 = vsyncpa [#allocation3], 0
    %13 = vsyncpa [#allocation6], 0
    %14 = vsyncpa [#allocation9], 0
    %15 = vsyncpa [#allocation4], 0
    // Predicated region
    $region2: #{tpu_custom_call.1} parent=1 // pred_check
      _
    $region3: #{tpu_custom_call.1} parent=1 // pred_check_branch
      %17 = sbr.rel (0) target = $region5
    $region4: #{tpu_custom_call.1} parent=1 // pred_region
      %s19 = ssub.s32 256, 256
      %20 = vsyncadd [#allocation3], %s19
      %s21 = sshll.u32 [#allocation2], 4
      %s22 = int_to_ptr.vmem [resolvable:$true] %s21
      %27 = dma.hbm_to_vmem [thread:$0]  %s0, 256, %s22, [#allocation3], 128, 128, 8
    $region5: #{tpu_custom_call.1} parent=1 // pred_fallthru
      _
    // Predicated region
    $region6: #{tpu_custom_call.1} parent=1 // pred_check
      _
    $region7: #{tpu_custom_call.1} parent=1 // pred_check_branch
      %29 = sbr.rel (0) target = $region9
    $region8: #{tpu_custom_call.1} parent=1 // pred_region
      %s31 = ssub.s32 512, 512
      %32 = vsyncadd [#allocation6], %s31
      %s33 = sshll.u32 [#allocation5], 4
      %s34 = int_to_ptr.vmem [resolvable:$true] %s33
      %39 = dma.hbm_to_vmem [thread:$0]  %s1, 512, %s34, [#allocation6], 128, 128, 8
    $region9: #{tpu_custom_call.1} parent=1 // pred_fallthru
      _
    // Predicated region
    $region10: #{tpu_custom_call.1} parent=1 // pred_check
      _
    $region11: #{tpu_custom_call.1} parent=1 // pred_check_branch
      %41 = sbr.rel (0) target = $region13
    $region12: #{tpu_custom_call.1} parent=1 // pred_region
      _
    $region13: #{tpu_custom_call.1} parent=1 // pred_fallthru
      _
    // Predicated region
    $region14: #{tpu_custom_call.1} parent=1 // pred_check
      _
    $region15: #{tpu_custom_call.1} parent=1 // pred_check_branch
      %43 = sbr.rel (0) target = $region17
    $region16: #{tpu_custom_call.1} parent=1 // pred_region
      %s45 = ssub.s32 2048, 2048
      %46 = vsyncadd [#allocation6], %s45
      %s47 = sshll.u32 [#allocation7], 4
      %s48 = int_to_ptr.vmem [resolvable:$true] %s47
      %53 = dma.hbm_to_vmem [thread:$0]  %s3, 2048, %s48, [#allocation6], 128, 128, 8
    $region17: #{tpu_custom_call.1} parent=1 // pred_fallthru
      _
    // Predicated region
    $region18: #{tpu_custom_call.1} parent=1 // pred_check
      _
    $region19: #{tpu_custom_call.1} parent=1 // pred_check_branch
      %55 = sbr.rel (0) target = $region21
    $region20: #{tpu_custom_call.1} parent=1 // pred_region
      _
    $region21: #{tpu_custom_call.1} parent=1 // pred_fallthru
      _
    // Predicated region
    $region22: #{tpu_custom_call.1} parent=1 // pred_check
      _
    $region23: #{tpu_custom_call.1} parent=1 // pred_check_branch
      %57 = sbr.rel (0) target = $region25
    $region24: #{tpu_custom_call.1} parent=1 // pred_region
      %s59 = ssub.s32 2048, 2048
      %60 = vsyncadd [#allocation9], %s59
      %s61 = sshll.u32 [#allocation8], 4
      %s62 = int_to_ptr.vmem [resolvable:$true] %s61
      %67 = dma.hbm_to_vmem [thread:$0]  %s5, 2048, %s62, [#allocation9], 128, 128, 8
    $region25: #{tpu_custom_call.1} parent=1 // pred_fallthru
      _
    // Predicated region
    $region26: #{tpu_custom_call.1} parent=1 // pred_check
      _
    $region27: #{tpu_custom_call.1} parent=1 // pred_check_branch
      %69 = sbr.rel (0) target = $region29
    $region28: #{tpu_custom_call.1} parent=1 // pred_region
      _
    $region29: #{tpu_custom_call.1} parent=1 // pred_fallthru
      _
    // Predicated region
    $region30: #{tpu_custom_call.1} parent=1 // pred_check
      _
    $region31: #{tpu_custom_call.1} parent=1 // pred_check_branch
      %71 = sbr.rel (0) target = $region33
    $region32: #{tpu_custom_call.1} parent=1 // pred_region
      %72 = dma.done [#allocation3], 256
    $region33: #{tpu_custom_call.1} parent=1 // pred_fallthru
      _
    // Predicated region
    $region34: #{tpu_custom_call.1} parent=1 // pred_check
      _
    $region35: #{tpu_custom_call.1} parent=1 // pred_check_branch
      %74 = sbr.rel (0) target = $region37
    $region36: #{tpu_custom_call.1} parent=1 // pred_region
      %75 = dma.done [#allocation6], 512
    $region37: #{tpu_custom_call.1} parent=1 // pred_fallthru
      _
    // Predicated region
    $region38: #{tpu_custom_call.1} parent=1 // pred_check
      _
    $region39: #{tpu_custom_call.1} parent=1 // pred_check_branch
      %77 = sbr.rel (0) target = $region41
    $region40: #{tpu_custom_call.1} parent=1 // pred_region
      %78 = dma.done [#allocation6], 2048
    $region41: #{tpu_custom_call.1} parent=1 // pred_fallthru
      _
    // Predicated region
    $region42: #{tpu_custom_call.1} parent=1 // pred_check
      _
    $region43: #{tpu_custom_call.1} parent=1 // pred_check_branch
      %80 = sbr.rel (0) target = $region45
    $region44: #{tpu_custom_call.1} parent=1 // pred_region
      %81 = dma.done [#allocation9], 2048
    $region45: #{tpu_custom_call.1} parent=1 // pred_fallthru
      _
    %v82 = vld [vmem:[#allocation2] sm:$0xff]
    %v83 = vld [vmem:[#allocation2 + $0x8] sm:$0xff]
    %v84 = vld [vmem:[#allocation5] sm:$0xff]
    %v85 = vld [vmem:[#allocation5 + $0x8] sm:$0xff]
    %v86 = vld [vmem:[#allocation5 + $0x10] sm:$0xff]
    %v87 = vld [vmem:[#allocation5 + $0x18] sm:$0xff]
    %v88 = vld [vmem:[%s2] sm:$0x1]
    %v90 = vlaneseq
    %v91 = vshrl.u32 %v90, 7
    %v92 = vsub.s32 0, %v91
    %v93 = vrot.slane %v88, %v92
    %vm95 = vcmask 261120
    %v97 = vsel %vm95, %v82, 0
    %v100 = vsel %vm95, %v83, 0
    %102 = vmatprep.subr.mxu0 0.0
    %103 = vmatpush1.msra.mxu0 %v84
    %104 = vmatprep.subr.mxu0 0.0
    %105 = vmatpush1.msra.mxu0 %v85
    %106 = vmatprep.subr.mxu0 0.0
    %107 = vmatpush1.msra.mxu0 %v86
    %108 = vmatprep.subr.mxu0 0.0
    %109 = vmatpush1.msra.mxu0 %v87
    %110 = vmatprep.subr.mxu0 0.0
    %111 = vmatpush1.msra.mxu0 0.0
    %112 = vmatprep.subr.mxu0 0.0
    %113 = vmatpush1.msra.mxu0 0.0
    %114 = vmatprep.subr.mxu0 0.0
    %115 = vmatpush1.msra.mxu0 0.0
    %116 = vmatprep.subr.mxu0 0.0
    %117 = vmatpush1.msra.mxu0 0.0
    %118 = vmatprep.subr.mxu0 0.0
    %119 = vmatpush1.msra.mxu0 0.0
    %120 = vmatprep.subr.mxu0 0.0
    %121 = vmatpush1.msra.mxu0 0.0
    %122 = vmatprep.subr.mxu0 0.0
    %123 = vmatpush1.msra.mxu0 0.0
    %124 = vmatprep.subr.mxu0 0.0
    %125 = vmatpush1.msra.mxu0 0.0
    %126 = vmatprep.subr.mxu0 0.0
    %127 = vmatpush1.msra.mxu0 0.0
    %128 = vmatprep.subr.mxu0 0.0
    %129 = vmatpush1.msra.mxu0 0.0
    %130 = vmatprep.subr.mxu0 0.0
    %131 = vmatpush1.msra.mxu0 0.0
    %132 = vmatprep.subr.mxu0 0.0
    %133 = vmatpush1.msra.mxu0 0.0
    %134 = vmatprep.subr.mxu0 0.0
    %135 = vmatpush1.msra.mxu0 0.0
    %136 = vmatprep.subr.mxu0 0.0
    %137 = vmatpush1.msra.mxu0 0.0
    %138 = vmatprep.subr.mxu0 0.0
    %139 = vmatpush1.msra.mxu0 0.0
    %140 = vmatprep.subr.mxu0 0.0
    %141 = vmatpush1.msra.mxu0 0.0
    %142 = vmatprep.subr.mxu0 0.0
    %143 = vmatpush1.msra.mxu0 0.0
    %144 = vmatprep.subr.mxu0 0.0
    %145 = vmatpush1.msra.mxu0 0.0
    %146 = vmatprep.subr.mxu0 0.0
    %147 = vmatpush1.msra.mxu0 0.0
    %148 = vmatprep.subr.mxu0 0.0
    %149 = vmatpush1.msra.mxu0 0.0
    %150 = vmatprep.subr.mxu0 0.0
    %151 = vmatpush1.msra.mxu0 0.0
    %152 = vmatprep.subr.mxu0 0.0
    %153 = vmatpush1.msra.mxu0 0.0
    %154 = vmatprep.subr.mxu0 0.0
    %155 = vmatpush1.msra.mxu0 0.0
    %156 = vmatprep.subr.mxu0 0.0
    %157 = vmatpush1.msra.mxu0 0.0
    %158 = vmatprep.subr.mxu0 0.0
    %159 = vmatpush1.msra.mxu0 0.0
    %160 = vmatprep.subr.mxu0 0.0
    %161 = vmatpush1.msra.mxu0 0.0
    %162 = vmatprep.subr.mxu0 0.0
    %163 = vmatpush1.msra.mxu0 0.0
    %164 = vmatprep.subr.mxu0 0.0
    %165 = vmatpush1.msra.mxu0 0.0
    %166 = vmatprep.mubr.f32.mxu0 0.0
    %167 = vmatmul.mubr.f32.gmra.mrb[0].mxu0 %v97
    %v168 = vpop.f32.mrb[0].mxu0
    %v169 = vadd.f32 %v93, %v168
    %v170 = vpop.f32.mrb[0].mxu0
    %171 = vmatprep.mubr.f32.mxu0 0.0
    %172 = vmatmul.mubr.f32.gmra.mrb[0].mxu0 %v100
    %v173 = vpop.f32.mrb[0].mxu0
    %v174 = vadd.f32 %v93, %v173
    %v175 = vpop.f32.mrb[0].mxu0
    %176 = vdwg.mxu0
    %v177 = vmax.f32 %v169, 0.0
    %v178 = vmax.f32 %v174, 0.0
    %v179 = vld [vmem:[#allocation7] sm:$0xff]
    %v180 = vld [vmem:[#allocation7 + $0x8] sm:$0xff]
    %v181 = vld [vmem:[#allocation7 + $0x10] sm:$0xff]
    %v182 = vld [vmem:[#allocation7 + $0x18] sm:$0xff]
    %v183 = vld [vmem:[#allocation7 + $0x20] sm:$0xff]
    %v184 = vld [vmem:[#allocation7 + $0x28] sm:$0xff]
    %v185 = vld [vmem:[#allocation7 + $0x30] sm:$0xff]
    %v186 = vld [vmem:[#allocation7 + $0x38] sm:$0xff]
    %v187 = vld [vmem:[#allocation7 + $0x40] sm:$0xff]
    %v188 = vld [vmem:[#allocation7 + $0x48] sm:$0xff]
    %v189 = vld [vmem:[#allocation7 + $0x50] sm:$0xff]
    %v190 = vld [vmem:[#allocation7 + $0x58] sm:$0xff]
    %v191 = vld [vmem:[#allocation7 + $0x60] sm:$0xff]
    %v192 = vld [vmem:[#allocation7 + $0x68] sm:$0xff]
    %v193 = vld [vmem:[#allocation7 + $0x70] sm:$0xff]
    %v194 = vld [vmem:[#allocation7 + $0x78] sm:$0xff]
    %v195 = vld [vmem:[%s4] sm:$0x1]
    %v197 = vlaneseq
    %v198 = vshrl.u32 %v197, 7
    %v199 = vsub.s32 0, %v198
    %v200 = vrot.slane %v195, %v199
    %202 = vmatprep.subr.mxu0 0.0
    %203 = vmatpush1.msra.mxu0 %v179
    %204 = vmatprep.subr.mxu0 0.0
    %205 = vmatpush1.msra.mxu0 %v180
    %206 = vmatprep.subr.mxu0 0.0
    %207 = vmatpush1.msra.mxu0 %v181
    %208 = vmatprep.subr.mxu0 0.0
    %209 = vmatpush1.msra.mxu0 %v182
    %210 = vmatprep.subr.mxu0 0.0
    %211 = vmatpush1.msra.mxu0 %v183
    %212 = vmatprep.subr.mxu0 0.0
    %213 = vmatpush1.msra.mxu0 %v184
    %214 = vmatprep.subr.mxu0 0.0
    %215 = vmatpush1.msra.mxu0 %v185
    %216 = vmatprep.subr.mxu0 0.0
    %217 = vmatpush1.msra.mxu0 %v186
    %218 = vmatprep.subr.mxu0 0.0
    %219 = vmatpush1.msra.mxu0 %v187
    %220 = vmatprep.subr.mxu0 0.0
    %221 = vmatpush1.msra.mxu0 %v188
    %222 = vmatprep.subr.mxu0 0.0
    %223 = vmatpush1.msra.mxu0 %v189
    %224 = vmatprep.subr.mxu0 0.0
    %225 = vmatpush1.msra.mxu0 %v190
    %226 = vmatprep.subr.mxu0 0.0
    %227 = vmatpush1.msra.mxu0 %v191
    %228 = vmatprep.subr.mxu0 0.0
    %229 = vmatpush1.msra.mxu0 %v192
    %230 = vmatprep.subr.mxu0 0.0
    %231 = vmatpush1.msra.mxu0 %v193
    %232 = vmatprep.subr.mxu0 0.0
    %233 = vmatpush1.msra.mxu0 %v194
    %234 = vmatprep.subr.mxu0 0.0
    %235 = vmatpush1.msra.mxu0 0.0
    %236 = vmatprep.subr.mxu0 0.0
    %237 = vmatpush1.msra.mxu0 0.0
    %238 = vmatprep.subr.mxu0 0.0
    %239 = vmatpush1.msra.mxu0 0.0
    %240 = vmatprep.subr.mxu0 0.0
    %241 = vmatpush1.msra.mxu0 0.0
    %242 = vmatprep.subr.mxu0 0.0
    %243 = vmatpush1.msra.mxu0 0.0
    %244 = vmatprep.subr.mxu0 0.0
    %245 = vmatpush1.msra.mxu0 0.0
    %246 = vmatprep.subr.mxu0 0.0
    %247 = vmatpush1.msra.mxu0 0.0
    %248 = vmatprep.subr.mxu0 0.0
    %249 = vmatpush1.msra.mxu0 0.0
    %250 = vmatprep.subr.mxu0 0.0
    %251 = vmatpush1.msra.mxu0 0.0
    %252 = vmatprep.subr.mxu0 0.0
    %253 = vmatpush1.msra.mxu0 0.0
    %254 = vmatprep.subr.mxu0 0.0
    %255 = vmatpush1.msra.mxu0 0.0
    %256 = vmatprep.subr.mxu0 0.0
    %257 = vmatpush1.msra.mxu0 0.0
    %258 = vmatprep.subr.mxu0 0.0
    %259 = vmatpush1.msra.mxu0 0.0
    %260 = vmatprep.subr.mxu0 0.0
    %261 = vmatpush1.msra.mxu0 0.0
    %262 = vmatprep.subr.mxu0 0.0
    %263 = vmatpush1.msra.mxu0 0.0
    %264 = vmatprep.subr.mxu0 0.0
    %265 = vmatpush1.msra.mxu0 0.0
    %266 = vmatprep.mubr.f32.mxu0 0.0
    %267 = vmatmul.mubr.f32.gmra.mrb[0].mxu0 %v177
    %v268 = vpop.f32.mrb[0].mxu0
    %v269 = vadd.f32 %v200, %v268
    %v270 = vpop.f32.mrb[0].mxu0
    %271 = vmatprep.mubr.f32.mxu0 0.0
    %272 = vmatmul.mubr.f32.gmra.mrb[0].mxu0 %v178
    %v273 = vpop.f32.mrb[0].mxu0
    %v274 = vadd.f32 %v200, %v273
    %v275 = vpop.f32.mrb[0].mxu0
    %276 = vdwg.mxu0
    %v277 = vmax.f32 %v269, 0.0
    %v278 = vmax.f32 %v274, 0.0
    %v279 = vld [vmem:[#allocation8] sm:$0xff]
    %v280 = vld [vmem:[#allocation8 + $0x8] sm:$0xff]
    %v281 = vld [vmem:[#allocation8 + $0x10] sm:$0xff]
    %v282 = vld [vmem:[#allocation8 + $0x18] sm:$0xff]
    %v283 = vld [vmem:[#allocation8 + $0x20] sm:$0xff]
    %v284 = vld [vmem:[#allocation8 + $0x28] sm:$0xff]
    %v285 = vld [vmem:[#allocation8 + $0x30] sm:$0xff]
    %v286 = vld [vmem:[#allocation8 + $0x38] sm:$0xff]
    %v287 = vld [vmem:[#allocation8 + $0x40] sm:$0xff]
    %v288 = vld [vmem:[#allocation8 + $0x48] sm:$0xff]
    %v289 = vld [vmem:[#allocation8 + $0x50] sm:$0xff]
    %v290 = vld [vmem:[#allocation8 + $0x58] sm:$0xff]
    %v291 = vld [vmem:[#allocation8 + $0x60] sm:$0xff]
    %v292 = vld [vmem:[#allocation8 + $0x68] sm:$0xff]
    %v293 = vld [vmem:[#allocation8 + $0x70] sm:$0xff]
    %v294 = vld [vmem:[#allocation8 + $0x78] sm:$0xff]
    %v295 = vld [vmem:[%s6] sm:$0x1]
    %v297 = vlaneseq
    %v298 = vshrl.u32 %v297, 7
    %v299 = vsub.s32 0, %v298
    %v300 = vrot.slane %v295, %v299
    %302 = vmatprep.subr.mxu0 0.0
    %303 = vmatpush1.msra.mxu0 %v279
    %304 = vmatprep.subr.mxu0 0.0
    %305 = vmatpush1.msra.mxu0 %v280
    %306 = vmatprep.subr.mxu0 0.0
    %307 = vmatpush1.msra.mxu0 %v281
    %308 = vmatprep.subr.mxu0 0.0
    %309 = vmatpush1.msra.mxu0 %v282
    %310 = vmatprep.subr.mxu0 0.0
    %311 = vmatpush1.msra.mxu0 %v283
    %312 = vmatprep.subr.mxu0 0.0
    %313 = vmatpush1.msra.mxu0 %v284
    %314 = vmatprep.subr.mxu0 0.0
    %315 = vmatpush1.msra.mxu0 %v285
    %316 = vmatprep.subr.mxu0 0.0
    %317 = vmatpush1.msra.mxu0 %v286
    %318 = vmatprep.subr.mxu0 0.0
    %319 = vmatpush1.msra.mxu0 %v287
    %320 = vmatprep.subr.mxu0 0.0
    %321 = vmatpush1.msra.mxu0 %v288
    %322 = vmatprep.subr.mxu0 0.0
    %323 = vmatpush1.msra.mxu0 %v289
    %324 = vmatprep.subr.mxu0 0.0
    %325 = vmatpush1.msra.mxu0 %v290
    %326 = vmatprep.subr.mxu0 0.0
    %327 = vmatpush1.msra.mxu0 %v291
    %328 = vmatprep.subr.mxu0 0.0
    %329 = vmatpush1.msra.mxu0 %v292
    %330 = vmatprep.subr.mxu0 0.0
    %331 = vmatpush1.msra.mxu0 %v293
    %332 = vmatprep.subr.mxu0 0.0
    %333 = vmatpush1.msra.mxu0 %v294
    %334 = vmatprep.subr.mxu0 0.0
    %335 = vmatpush1.msra.mxu0 0.0
    %336 = vmatprep.subr.mxu0 0.0
    %337 = vmatpush1.msra.mxu0 0.0
    %338 = vmatprep.subr.mxu0 0.0
    %339 = vmatpush1.msra.mxu0 0.0
    %340 = vmatprep.subr.mxu0 0.0
    %341 = vmatpush1.msra.mxu0 0.0
    %342 = vmatprep.subr.mxu0 0.0
    %343 = vmatpush1.msra.mxu0 0.0
    %344 = vmatprep.subr.mxu0 0.0
    %345 = vmatpush1.msra.mxu0 0.0
    %346 = vmatprep.subr.mxu0 0.0
    %347 = vmatpush1.msra.mxu0 0.0
    %348 = vmatprep.subr.mxu0 0.0
    %349 = vmatpush1.msra.mxu0 0.0
    %350 = vmatprep.subr.mxu0 0.0
    %351 = vmatpush1.msra.mxu0 0.0
    %352 = vmatprep.subr.mxu0 0.0
    %353 = vmatpush1.msra.mxu0 0.0
    %354 = vmatprep.subr.mxu0 0.0
    %355 = vmatpush1.msra.mxu0 0.0
    %356 = vmatprep.subr.mxu0 0.0
    %357 = vmatpush1.msra.mxu0 0.0
    %358 = vmatprep.subr.mxu0 0.0
    %359 = vmatpush1.msra.mxu0 0.0
    %360 = vmatprep.subr.mxu0 0.0
    %361 = vmatpush1.msra.mxu0 0.0
    %362 = vmatprep.subr.mxu0 0.0
    %363 = vmatpush1.msra.mxu0 0.0
    %364 = vmatprep.subr.mxu0 0.0
    %365 = vmatpush1.msra.mxu0 0.0
    %366 = vmatprep.mubr.f32.mxu0 0.0
    %367 = vmatmul.mubr.f32.gmra.mrb[0].mxu0 %v277
    %v368 = vpop.f32.mrb[0].mxu0
    %v369 = vadd.f32 %v300, %v368
    %v370 = vpop.f32.mrb[0].mxu0
    %371 = vmatprep.mubr.f32.mxu0 0.0
    %372 = vmatmul.mubr.f32.gmra.mrb[0].mxu0 %v278
    %v373 = vpop.f32.mrb[0].mxu0
    %v374 = vadd.f32 %v300, %v373
    %v375 = vpop.f32.mrb[0].mxu0
    %376 = vdwg.mxu0
    %377 = vst [vmem:[#allocation10] sm:$0xff] %v369
    %378 = vst [vmem:[#allocation10 + $0x8] sm:$0xff] %v374
    // Predicated region
    $region46: #{tpu_custom_call.1} parent=1 // pred_check
      _
    $region47: #{tpu_custom_call.1} parent=1 // pred_check_branch
      %380 = sbr.rel (0) target = $region49
    $region48: #{tpu_custom_call.1} parent=1 // pred_region
      %s382 = ssub.s32 256, 256
      %383 = vsyncadd [#allocation4], %s382
      %s384 = sshll.u32 [#allocation10], 4
      %s385 = int_to_ptr.vmem [resolvable:$true] %s384
      %390 = dma.vmem_to_hbm [thread:$0]  %s385, 256, %s7, [#allocation4], 128, 128, 8
    $region49: #{tpu_custom_call.1} parent=1 // pred_fallthru
      _
    // Predicated region
    $region50: #{tpu_custom_call.1} parent=1 // pred_check
      _
    $region51: #{tpu_custom_call.1} parent=1 // pred_check_branch
      %392 = sbr.rel (0) target = $region53
    $region52: #{tpu_custom_call.1} parent=1 // pred_region
      %393 = dma.done [#allocation4], 256
    $region53: #{tpu_custom_call.1} parent=1 // pred_fallthru
      _
    %394 = vsyncpa [#allocation3], 1
    %395 = vsyncpa [#allocation6], 1
    %396 = vsyncpa [#allocation9], 1
    %397 = vsyncpa [#allocation4], 1

// kernel: tpu_custom_call.1
$region0: #{tpu_custom_call.1}
  #allocation0 [shape = 'u32[]', space=smem, size = 0x4, offset = 0x4, fixed_abs, tag = 'smem constant byte address 0x4 - core index']
  #allocation1 [shape = 'u32[144,128]{1,0:T(1,128)}', space=vmem, size = 0x12000, scoped, tag = 'internal scratch']
  %s0 = inlined_call_operand.hbm [shape: f32[16,32], index: 0, kind: input, shape index: {}]
  %s1 = inlined_call_operand.hbm [shape: f32[32,128], index: 1, kind: input, shape index: {}]
  %s2 = inlined_call_operand.vmem [shape: f32[1,128], index: 2, kind: input, shape index: {}]
  %s3 = inlined_call_operand.hbm [shape: f32[128,128], index: 3, kind: input, shape index: {}]
  %s4 = inlined_call_operand.vmem [shape: f32[1,128], index: 4, kind: input, shape index: {}]
  %s5 = inlined_call_operand.hbm [shape: f32[128,128], index: 5, kind: input, shape index: {}]
  %s6 = inlined_call_operand.vmem [shape: f32[1,128], index: 6, kind: input, shape index: {}]
  %s7 = inlined_call_operand.hbm [shape: f32[16,128], index: 7, kind: output, shape index: {}]
  %s8 = sld [smem:[#allocation0]]
  $region54: #{tpu_custom_call.1} parent=0
    _
  %s10 = ssub.s32 1, %s8
  %s11 = scalar_select 0, %s10, %s8
  $region1: #{tpu_custom_call.1} parent=0
    #allocation2 [shape = 'u8[8192]{0}', space=vmem, size = 0x2000, scoped, tag = 'input window, operand 0, single buffered']
    #allocation3 [shape = 's32[1]{0}', space=sflag, size = 0x4, scoped, tag = 'scoped memory for tpu_custom_call.1']
    #allocation4 [shape = 's32[1]{0}', space=sflag, size = 0x4, scoped, tag = 'scoped memory for tpu_custom_call.1']
    #allocation5 [shape = 'u8[16384]{0}', space=vmem, size = 0x4000, scoped, tag = 'input window, operand 1, single buffered']
    #allocation6 [shape = 's32[1]{0}', space=sflag, size = 0x4, scoped, tag = 'scoped memory for tpu_custom_call.1']
    #allocation7 [shape = 'u8[65536]{0}', space=vmem, size = 0x10000, scoped, tag = 'input window, operand 3, single buffered']
    #allocation8 [shape = 'u8[65536]{0}', space=vmem, size = 0x10000, scoped, tag = 'input window, operand 5, single buffered']
    #allocation9 [shape = 's32[1]{0}', space=sflag, size = 0x4, scoped, tag = 'scoped memory for tpu_custom_call.1']
    #allocation10 [shape = 'u8[8192]{0}', space=vmem, size = 0x2000, scoped, tag = 'output window, operand 0, single buffered']
    %12 = vsyncpa [#allocation3], 0
    %13 = vsyncpa [#allocation6], 0
    %14 = vsyncpa [#allocation9], 0
    %15 = vsyncpa [#allocation4], 0
    // Predicated region
    $region2: #{tpu_custom_call.1} parent=1 // pred_check
      _
    $region3: #{tpu_custom_call.1} parent=1 // pred_check_branch
      %17 = sbr.rel (0) target = $region5
    $region4: #{tpu_custom_call.1} parent=1 // pred_region
      %s19 = ssub.s32 256, 256
      %20 = vsyncadd [#allocation3], %s19
      %s21 = sshll.u32 [#allocation2], 4
      %s22 = int_to_ptr.vmem [resolvable:$true] %s21
      %27 = dma.hbm_to_vmem [thread:$0]  %s0, 256, %s22, [#allocation3], 128, 128, 8
    $region5: #{tpu_custom_call.1} parent=1 // pred_fallthru
      _
    // Predicated region
    $region6: #{tpu_custom_call.1} parent=1 // pred_check
      _
    $region7: #{tpu_custom_call.1} parent=1 // pred_check_branch
      %29 = sbr.rel (0) target = $region9
    $region8: #{tpu_custom_call.1} parent=1 // pred_region
      %s31 = ssub.s32 512, 512
      %32 = vsyncadd [#allocation6], %s31
      %s33 = sshll.u32 [#allocation5], 4
      %s34 = int_to_ptr.vmem [resolvable:$true] %s33
      %39 = dma.hbm_to_vmem [thread:$0]  %s1, 512, %s34, [#allocation6], 128, 128, 8
    $region9: #{tpu_custom_call.1} parent=1 // pred_fallthru
      _
    // Predicated region
    $region10: #{tpu_custom_call.1} parent=1 // pred_check
      _
    $region11: #{tpu_custom_call.1} parent=1 // pred_check_branch
      %41 = sbr.rel (0) target = $region13
    $region12: #{tpu_custom_call.1} parent=1 // pred_region
      _
    $region13: #{tpu_custom_call.1} parent=1 // pred_fallthru
      _
    // Predicated region
    $region14: #{tpu_custom_call.1} parent=1 // pred_check
      _
    $region15: #{tpu_custom_call.1} parent=1 // pred_check_branch
      %43 = sbr.rel (0) target = $region17
    $region16: #{tpu_custom_call.1} parent=1 // pred_region
      %s45 = ssub.s32 2048, 2048
      %46 = vsyncadd [#allocation6], %s45
      %s47 = sshll.u32 [#allocation7], 4
      %s48 = int_to_ptr.vmem [resolvable:$true] %s47
      %53 = dma.hbm_to_vmem [thread:$0]  %s3, 2048, %s48, [#allocation6], 128, 128, 8
    $region17: #{tpu_custom_call.1} parent=1 // pred_fallthru
      _
    // Predicated region
    $region18: #{tpu_custom_call.1} parent=1 // pred_check
      _
    $region19: #{tpu_custom_call.1} parent=1 // pred_check_branch
      %55 = sbr.rel (0) target = $region21
    $region20: #{tpu_custom_call.1} parent=1 // pred_region
      _
    $region21: #{tpu_custom_call.1} parent=1 // pred_fallthru
      _
    // Predicated region
    $region22: #{tpu_custom_call.1} parent=1 // pred_check
      _
    $region23: #{tpu_custom_call.1} parent=1 // pred_check_branch
      %57 = sbr.rel (0) target = $region25
    $region24: #{tpu_custom_call.1} parent=1 // pred_region
      %s59 = ssub.s32 2048, 2048
      %60 = vsyncadd [#allocation9], %s59
      %s61 = sshll.u32 [#allocation8], 4
      %s62 = int_to_ptr.vmem [resolvable:$true] %s61
      %67 = dma.hbm_to_vmem [thread:$0]  %s5, 2048, %s62, [#allocation9], 128, 128, 8
    $region25: #{tpu_custom_call.1} parent=1 // pred_fallthru
      _
    // Predicated region
    $region26: #{tpu_custom_call.1} parent=1 // pred_check
      _
    $region27: #{tpu_custom_call.1} parent=1 // pred_check_branch
      %69 = sbr.rel (0) target = $region29
    $region28: #{tpu_custom_call.1} parent=1 // pred_region
      _
    $region29: #{tpu_custom_call.1} parent=1 // pred_fallthru
      _
    // Predicated region
    $region30: #{tpu_custom_call.1} parent=1 // pred_check
      _
    $region31: #{tpu_custom_call.1} parent=1 // pred_check_branch
      %71 = sbr.rel (0) target = $region33
    $region32: #{tpu_custom_call.1} parent=1 // pred_region
      %72 = dma.done [#allocation3], 256
    $region33: #{tpu_custom_call.1} parent=1 // pred_fallthru
      _
    // Predicated region
    $region34: #{tpu_custom_call.1} parent=1 // pred_check
      _
    $region35: #{tpu_custom_call.1} parent=1 // pred_check_branch
      %74 = sbr.rel (0) target = $region37
    $region36: #{tpu_custom_call.1} parent=1 // pred_region
      %75 = dma.done [#allocation6], 512
    $region37: #{tpu_custom_call.1} parent=1 // pred_fallthru
      _
    // Predicated region
    $region38: #{tpu_custom_call.1} parent=1 // pred_check
      _
    $region39: #{tpu_custom_call.1} parent=1 // pred_check_branch
      %77 = sbr.rel (0) target = $region41
    $region40: #{tpu_custom_call.1} parent=1 // pred_region
      %78 = dma.done [#allocation6], 2048
    $region41: #{tpu_custom_call.1} parent=1 // pred_fallthru
      _
    // Predicated region
    $region42: #{tpu_custom_call.1} parent=1 // pred_check
      _
    $region43: #{tpu_custom_call.1} parent=1 // pred_check_branch
      %80 = sbr.rel (0) target = $region45
    $region44: #{tpu_custom_call.1} parent=1 // pred_region
      %81 = dma.done [#allocation9], 2048
    $region45: #{tpu_custom_call.1} parent=1 // pred_fallthru
      _
    %v82 = vld [vmem:[#allocation2] sm:$0xff]
    %v83 = vld [vmem:[#allocation2 + $0x8] sm:$0xff]
    %v84 = vld [vmem:[#allocation5] sm:$0xff]
    %v85 = vld [vmem:[#allocation5 + $0x8] sm:$0xff]
    %v86 = vld [vmem:[#allocation5 + $0x10] sm:$0xff]
    %v87 = vld [vmem:[#allocation5 + $0x18] sm:$0xff]
    %v88 = vld [vmem:[%s2] sm:$0x1]
    %v90 = vlaneseq
    %v91 = vshrl.u32 %v90, 7
    %v92 = vsub.s32 0, %v91
    %v93 = vrot.slane %v88, %v92
    %vm95 = vcmask 261120
    %v97 = vsel %vm95, %v82, 0
    %v100 = vsel %vm95, %v83, 0
    %102 = vmatprep.subr.mxu0 0.0
    %103 = vmatpush1.msra.mxu0 %v84
    %104 = vmatprep.subr.mxu0 0.0
    %105 = vmatpush1.msra.mxu0 %v85
    %106 = vmatprep.subr.mxu0 0.0
    %107 = vmatpush1.msra.mxu0 %v86
    %108 = vmatprep.subr.mxu0 0.0
    %109 = vmatpush1.msra.mxu0 %v87
    %110 = vmatprep.subr.mxu0 0.0
    %111 = vmatpush1.msra.mxu0 0.0
    %112 = vmatprep.subr.mxu0 0.0
    %113 = vmatpush1.msra.mxu0 0.0
    %114 = vmatprep.subr.mxu0 0.0
    %115 = vmatpush1.msra.mxu0 0.0
    %116 = vmatprep.subr.mxu0 0.0
    %117 = vmatpush1.msra.mxu0 0.0
    %118 = vmatprep.subr.mxu0 0.0
    %119 = vmatpush1.msra.mxu0 0.0
    %120 = vmatprep.subr.mxu0 0.0
    %121 = vmatpush1.msra.mxu0 0.0
    %122 = vmatprep.subr.mxu0 0.0
    %123 = vmatpush1.msra.mxu0 0.0
    %124 = vmatprep.subr.mxu0 0.0
    %125 = vmatpush1.msra.mxu0 0.0
    %126 = vmatprep.subr.mxu0 0.0
    %127 = vmatpush1.msra.mxu0 0.0
    %128 = vmatprep.subr.mxu0 0.0
    %129 = vmatpush1.msra.mxu0 0.0
    %130 = vmatprep.subr.mxu0 0.0
    %131 = vmatpush1.msra.mxu0 0.0
    %132 = vmatprep.subr.mxu0 0.0
    %133 = vmatpush1.msra.mxu0 0.0
    %134 = vmatprep.subr.mxu0 0.0
    %135 = vmatpush1.msra.mxu0 0.0
    %136 = vmatprep.subr.mxu0 0.0
    %137 = vmatpush1.msra.mxu0 0.0
    %138 = vmatprep.subr.mxu0 0.0
    %139 = vmatpush1.msra.mxu0 0.0
    %140 = vmatprep.subr.mxu0 0.0
    %141 = vmatpush1.msra.mxu0 0.0
    %142 = vmatprep.subr.mxu0 0.0
    %143 = vmatpush1.msra.mxu0 0.0
    %144 = vmatprep.subr.mxu0 0.0
    %145 = vmatpush1.msra.mxu0 0.0
    %146 = vmatprep.subr.mxu0 0.0
    %147 = vmatpush1.msra.mxu0 0.0
    %148 = vmatprep.subr.mxu0 0.0
    %149 = vmatpush1.msra.mxu0 0.0
    %150 = vmatprep.subr.mxu0 0.0
    %151 = vmatpush1.msra.mxu0 0.0
    %152 = vmatprep.subr.mxu0 0.0
    %153 = vmatpush1.msra.mxu0 0.0
    %154 = vmatprep.subr.mxu0 0.0
    %155 = vmatpush1.msra.mxu0 0.0
    %156 = vmatprep.subr.mxu0 0.0
    %157 = vmatpush1.msra.mxu0 0.0
    %158 = vmatprep.subr.mxu0 0.0
    %159 = vmatpush1.msra.mxu0 0.0
    %160 = vmatprep.subr.mxu0 0.0
    %161 = vmatpush1.msra.mxu0 0.0
    %162 = vmatprep.subr.mxu0 0.0
    %163 = vmatpush1.msra.mxu0 0.0
    %164 = vmatprep.subr.mxu0 0.0
    %165 = vmatpush1.msra.mxu0 0.0
    %166 = vmatprep.mubr.f32.mxu0 0.0
    %167 = vmatmul.mubr.f32.gmra.mrb[0].mxu0 %v97
    %v168 = vpop.f32.mrb[0].mxu0
    %v169 = vadd.f32 %v93, %v168
    %v170 = vpop.f32.mrb[0].mxu0
    %171 = vmatprep.mubr.f32.mxu0 0.0
    %172 = vmatmul.mubr.f32.gmra.mrb[0].mxu0 %v100
    %v173 = vpop.f32.mrb[0].mxu0
    %v174 = vadd.f32 %v93, %v173
    %v175 = vpop.f32.mrb[0].mxu0
    %176 = vdwg.mxu0
    %v177 = vmax.f32 %v169, 0.0
    %v178 = vmax.f32 %v174, 0.0
    %v179 = vld [vmem:[#allocation7] sm:$0xff]
    %v180 = vld [vmem:[#allocation7 + $0x8] sm:$0xff]
    %v181 = vld [vmem:[#allocation7 + $0x10] sm:$0xff]
    %v182 = vld [vmem:[#allocation7 + $0x18] sm:$0xff]
    %v183 = vld [vmem:[#allocation7 + $0x20] sm:$0xff]
    %v184 = vld [vmem:[#allocation7 + $0x28] sm:$0xff]
    %v185 = vld [vmem:[#allocation7 + $0x30] sm:$0xff]
    %v186 = vld [vmem:[#allocation7 + $0x38] sm:$0xff]
    %v187 = vld [vmem:[#allocation7 + $0x40] sm:$0xff]
    %v188 = vld [vmem:[#allocation7 + $0x48] sm:$0xff]
    %v189 = vld [vmem:[#allocation7 + $0x50] sm:$0xff]
    %v190 = vld [vmem:[#allocation7 + $0x58] sm:$0xff]
    %v191 = vld [vmem:[#allocation7 + $0x60] sm:$0xff]
    %v192 = vld [vmem:[#allocation7 + $0x68] sm:$0xff]
    %v193 = vld [vmem:[#allocation7 + $0x70] sm:$0xff]
    %v194 = vld [vmem:[#allocation7 + $0x78] sm:$0xff]
    %v195 = vld [vmem:[%s4] sm:$0x1]
    %v197 = vlaneseq
    %v198 = vshrl.u32 %v197, 7
    %v199 = vsub.s32 0, %v198
    %v200 = vrot.slane %v195, %v199
    %202 = vmatprep.subr.mxu0 0.0
    %203 = vmatpush1.msra.mxu0 %v179
    %204 = vmatprep.subr.mxu0 0.0
    %205 = vmatpush1.msra.mxu0 %v180
    %206 = vmatprep.subr.mxu0 0.0
    %207 = vmatpush1.msra.mxu0 %v181
    %208 = vmatprep.subr.mxu0 0.0
    %209 = vmatpush1.msra.mxu0 %v182
    %210 = vmatprep.subr.mxu0 0.0
    %211 = vmatpush1.msra.mxu0 %v183
    %212 = vmatprep.subr.mxu0 0.0
    %213 = vmatpush1.msra.mxu0 %v184
    %214 = vmatprep.subr.mxu0 0.0
    %215 = vmatpush1.msra.mxu0 %v185
    %216 = vmatprep.subr.mxu0 0.0
    %217 = vmatpush1.msra.mxu0 %v186
    %218 = vmatprep.subr.mxu0 0.0
    %219 = vmatpush1.msra.mxu0 %v187
    %220 = vmatprep.subr.mxu0 0.0
    %221 = vmatpush1.msra.mxu0 %v188
    %222 = vmatprep.subr.mxu0 0.0
    %223 = vmatpush1.msra.mxu0 %v189
    %224 = vmatprep.subr.mxu0 0.0
    %225 = vmatpush1.msra.mxu0 %v190
    %226 = vmatprep.subr.mxu0 0.0
    %227 = vmatpush1.msra.mxu0 %v191
    %228 = vmatprep.subr.mxu0 0.0
    %229 = vmatpush1.msra.mxu0 %v192
    %230 = vmatprep.subr.mxu0 0.0
    %231 = vmatpush1.msra.mxu0 %v193
    %232 = vmatprep.subr.mxu0 0.0
    %233 = vmatpush1.msra.mxu0 %v194
    %234 = vmatprep.subr.mxu0 0.0
    %235 = vmatpush1.msra.mxu0 0.0
    %236 = vmatprep.subr.mxu0 0.0
    %237 = vmatpush1.msra.mxu0 0.0
    %238 = vmatprep.subr.mxu0 0.0
    %239 = vmatpush1.msra.mxu0 0.0
    %240 = vmatprep.subr.mxu0 0.0
    %241 = vmatpush1.msra.mxu0 0.0
    %242 = vmatprep.subr.mxu0 0.0
    %243 = vmatpush1.msra.mxu0 0.0
    %244 = vmatprep.subr.mxu0 0.0
    %245 = vmatpush1.msra.mxu0 0.0
    %246 = vmatprep.subr.mxu0 0.0
    %247 = vmatpush1.msra.mxu0 0.0
    %248 = vmatprep.subr.mxu0 0.0
    %249 = vmatpush1.msra.mxu0 0.0
    %250 = vmatprep.subr.mxu0 0.0
    %251 = vmatpush1.msra.mxu0 0.0
    %252 = vmatprep.subr.mxu0 0.0
    %253 = vmatpush1.msra.mxu0 0.0
    %254 = vmatprep.subr.mxu0 0.0
    %255 = vmatpush1.msra.mxu0 0.0
    %256 = vmatprep.subr.mxu0 0.0
    %257 = vmatpush1.msra.mxu0 0.0
    %258 = vmatprep.subr.mxu0 0.0
    %259 = vmatpush1.msra.mxu0 0.0
    %260 = vmatprep.subr.mxu0 0.0
    %261 = vmatpush1.msra.mxu0 0.0
    %262 = vmatprep.subr.mxu0 0.0
    %263 = vmatpush1.msra.mxu0 0.0
    %264 = vmatprep.subr.mxu0 0.0
    %265 = vmatpush1.msra.mxu0 0.0
    %266 = vmatprep.mubr.f32.mxu0 0.0
    %267 = vmatmul.mubr.f32.gmra.mrb[0].mxu0 %v177
    %v268 = vpop.f32.mrb[0].mxu0
    %v269 = vadd.f32 %v200, %v268
    %v270 = vpop.f32.mrb[0].mxu0
    %271 = vmatprep.mubr.f32.mxu0 0.0
    %272 = vmatmul.mubr.f32.gmra.mrb[0].mxu0 %v178
    %v273 = vpop.f32.mrb[0].mxu0
    %v274 = vadd.f32 %v200, %v273
    %v275 = vpop.f32.mrb[0].mxu0
    %276 = vdwg.mxu0
    %v277 = vmax.f32 %v269, 0.0
    %v278 = vmax.f32 %v274, 0.0
    %v279 = vld [vmem:[#allocation8] sm:$0xff]
    %v280 = vld [vmem:[#allocation8 + $0x8] sm:$0xff]
    %v281 = vld [vmem:[#allocation8 + $0x10] sm:$0xff]
    %v282 = vld [vmem:[#allocation8 + $0x18] sm:$0xff]
    %v283 = vld [vmem:[#allocation8 + $0x20] sm:$0xff]
    %v284 = vld [vmem:[#allocation8 + $0x28] sm:$0xff]
    %v285 = vld [vmem:[#allocation8 + $0x30] sm:$0xff]
    %v286 = vld [vmem:[#allocation8 + $0x38] sm:$0xff]
    %v287 = vld [vmem:[#allocation8 + $0x40] sm:$0xff]
    %v288 = vld [vmem:[#allocation8 + $0x48] sm:$0xff]
    %v289 = vld [vmem:[#allocation8 + $0x50] sm:$0xff]
    %v290 = vld [vmem:[#allocation8 + $0x58] sm:$0xff]
    %v291 = vld [vmem:[#allocation8 + $0x60] sm:$0xff]
    %v292 = vld [vmem:[#allocation8 + $0x68] sm:$0xff]
    %v293 = vld [vmem:[#allocation8 + $0x70] sm:$0xff]
    %v294 = vld [vmem:[#allocation8 + $0x78] sm:$0xff]
    %v295 = vld [vmem:[%s6] sm:$0x1]
    %v297 = vlaneseq
    %v298 = vshrl.u32 %v297, 7
    %v299 = vsub.s32 0, %v298
    %v300 = vrot.slane %v295, %v299
    %302 = vmatprep.subr.mxu0 0.0
    %303 = vmatpush1.msra.mxu0 %v279
    %304 = vmatprep.subr.mxu0 0.0
    %305 = vmatpush1.msra.mxu0 %v280
    %306 = vmatprep.subr.mxu0 0.0
    %307 = vmatpush1.msra.mxu0 %v281
    %308 = vmatprep.subr.mxu0 0.0
    %309 = vmatpush1.msra.mxu0 %v282
    %310 = vmatprep.subr.mxu0 0.0
    %311 = vmatpush1.msra.mxu0 %v283
    %312 = vmatprep.subr.mxu0 0.0
    %313 = vmatpush1.msra.mxu0 %v284
    %314 = vmatprep.subr.mxu0 0.0
    %315 = vmatpush1.msra.mxu0 %v285
    %316 = vmatprep.subr.mxu0 0.0
    %317 = vmatpush1.msra.mxu0 %v286
    %318 = vmatprep.subr.mxu0 0.0
    %319 = vmatpush1.msra.mxu0 %v287
    %320 = vmatprep.subr.mxu0 0.0
    %321 = vmatpush1.msra.mxu0 %v288
    %322 = vmatprep.subr.mxu0 0.0
    %323 = vmatpush1.msra.mxu0 %v289
    %324 = vmatprep.subr.mxu0 0.0
    %325 = vmatpush1.msra.mxu0 %v290
    %326 = vmatprep.subr.mxu0 0.0
    %327 = vmatpush1.msra.mxu0 %v291
    %328 = vmatprep.subr.mxu0 0.0
    %329 = vmatpush1.msra.mxu0 %v292
    %330 = vmatprep.subr.mxu0 0.0
    %331 = vmatpush1.msra.mxu0 %v293
    %332 = vmatprep.subr.mxu0 0.0
    %333 = vmatpush1.msra.mxu0 %v294
    %334 = vmatprep.subr.mxu0 0.0
    %335 = vmatpush1.msra.mxu0 0.0
    %336 = vmatprep.subr.mxu0 0.0
    %337 = vmatpush1.msra.mxu0 0.0
    %338 = vmatprep.subr.mxu0 0.0
    %339 = vmatpush1.msra.mxu0 0.0
    %340 = vmatprep.subr.mxu0 0.0
    %341 = vmatpush1.msra.mxu0 0.0
    %342 = vmatprep.subr.mxu0 0.0
    %343 = vmatpush1.msra.mxu0 0.0
    %344 = vmatprep.subr.mxu0 0.0
    %345 = vmatpush1.msra.mxu0 0.0
    %346 = vmatprep.subr.mxu0 0.0
    %347 = vmatpush1.msra.mxu0 0.0
    %348 = vmatprep.subr.mxu0 0.0
    %349 = vmatpush1.msra.mxu0 0.0
    %350 = vmatprep.subr.mxu0 0.0
    %351 = vmatpush1.msra.mxu0 0.0
    %352 = vmatprep.subr.mxu0 0.0
    %353 = vmatpush1.msra.mxu0 0.0
    %354 = vmatprep.subr.mxu0 0.0
    %355 = vmatpush1.msra.mxu0 0.0
    %356 = vmatprep.subr.mxu0 0.0
    %357 = vmatpush1.msra.mxu0 0.0
    %358 = vmatprep.subr.mxu0 0.0
    %359 = vmatpush1.msra.mxu0 0.0
    %360 = vmatprep.subr.mxu0 0.0
    %361 = vmatpush1.msra.mxu0 0.0
    %362 = vmatprep.subr.mxu0 0.0
    %363 = vmatpush1.msra.mxu0 0.0
    %364 = vmatprep.subr.mxu0 0.0
    %365 = vmatpush1.msra.mxu0 0.0
    %366 = vmatprep.mubr.f32.mxu0 0.0
    %367 = vmatmul.mubr.f32.gmra.mrb[0].mxu0 %v277
    %v368 = vpop.f32.mrb[0].mxu0
    %v369 = vadd.f32 %v300, %v368
    %v370 = vpop.f32.mrb[0].mxu0
    %371 = vmatprep.mubr.f32.mxu0 0.0
    %372 = vmatmul.mubr.f32.gmra.mrb[0].mxu0 %v278
    %v373 = vpop.f32.mrb[0].mxu0
    %v374 = vadd.f32 %v300, %v373
    %v375 = vpop.f32.mrb[0].mxu0
    %376 = vdwg.mxu0
    %377 = vst [vmem:[#allocation10] sm:$0xff] %v369
    %378 = vst [vmem:[#allocation10 + $0x8] sm:$0xff] %v374
    // Predicated region
    $region46: #{tpu_custom_call.1} parent=1 // pred_check
      _
    $region47: #{tpu_custom_call.1} parent=1 // pred_check_branch
      %380 = sbr.rel (0) target = $region49
    $region48: #{tpu_custom_call.1} parent=1 // pred_region
      %s382 = ssub.s32 256, 256
      %383 = vsyncadd [#allocation4], %s382
      %s384 = sshll.u32 [#allocation10], 4
      %s385 = int_to_ptr.vmem [resolvable:$true] %s384
      %390 = dma.vmem_to_hbm [thread:$0]  %s385, 256, %s7, [#allocation4], 128, 128, 8
    $region49: #{tpu_custom_call.1} parent=1 // pred_fallthru
      _
    // Predicated region
    $region50: #{tpu_custom_call.1} parent=1 // pred_check
      _
    $region51: #{tpu_custom_call.1} parent=1 // pred_check_branch
      %392 = sbr.rel (0) target = $region53
    $region52: #{tpu_custom_call.1} parent=1 // pred_region
      %393 = dma.done [#allocation4], 256
    $region53: #{tpu_custom_call.1} parent=1 // pred_fallthru
      _
    %394 = vsyncpa [#allocation3], 1
    %395 = vsyncpa [#allocation6], 1
    %396 = vsyncpa [#allocation9], 1
    %397 = vsyncpa [#allocation4], 1

</llo_original>
